<compile_context>
chip_gen: v5e
topology: v5e:2x2
jax: 0.10.0
libtpu: 0.0.40
codegen_flags: <defaults>
</compile_context>

<pallas_src>
import functools

import jax
import jax.numpy as jnp
from jax import lax
from jax.experimental import pallas as pl
from jax.experimental.pallas import tpu as pltpu


def _round_up(x, m):
    return ((x + m - 1) // m) * m


# ----------------------------- LayerNorm kernel -----------------------------

def _layernorm_kernel(x_ref, gamma_ref, beta_ref, o_ref, *, eps, true_dim):
    x = x_ref[...].astype(jnp.float32)                     # (tm, Kp)
    kp = x.shape[-1]
    inv_d = 1.0 / float(true_dim)
    mean = jnp.sum(x, axis=-1, keepdims=True) * inv_d      # padded cols are 0
    xc = x - mean
    if kp != true_dim:                                     # mask padded lanes
        mask = lax.broadcasted_iota(jnp.int32, (1, kp), 1) < true_dim
        xc = jnp.where(mask, xc, 0.0)
    var = jnp.sum(xc * xc, axis=-1, keepdims=True) * inv_d  # biased (torch LN)
    inv = lax.rsqrt(var + eps)
    y = xc * inv
    y = y * gamma_ref[...].astype(jnp.float32) + beta_ref[...].astype(jnp.float32)
    o_ref[...] = y.astype(o_ref.dtype)


def layernorm_pallas(x, gamma, beta, *, eps=1e-5, tile_rows=512):
    """x: (..., dim). LayerNorm over last axis with affine params."""
    orig_shape = x.shape
    dim = orig_shape[-1]
    x2 = x.reshape(-1, dim)
    rows = x2.shape[0]
    itemsize = x.dtype.itemsize

    # Lane-dense: pad feature axis to a multiple of 128.
    kp = max(_round_up(dim, 128), 128)

    # Row tile: as big as possible while (2 in + 2 out) buffers stay well
    # under the default scoped VMEM limit on every chip generation.
    budget = 12 * 1024 * 1024
    max_tm = max(8, (budget // (4 * kp * itemsize)) // 8 * 8)
    tm = min(tile_rows, max_tm, _round_up(rows, 8))
    rows_p = _round_up(rows, tm)

    x_p = jnp.pad(x2, ((0, rows_p - rows), (0, kp - dim)))
    g_p = jnp.pad(gamma.reshape(1, dim), ((0, 0), (0, kp - dim)))
    b_p = jnp.pad(beta.reshape(1, dim), ((0, 0), (0, kp - dim)))

    cost = pl.CostEstimate(
        flops=8 * rows_p * kp,
        transcendentals=rows_p,
        bytes_accessed=2 * rows_p * kp * itemsize + 2 * kp * 4,
    )

    out = pl.pallas_call(
        functools.partial(_layernorm_kernel, eps=eps, true_dim=dim),
        out_shape=jax.ShapeDtypeStruct((rows_p, kp), x.dtype),
        grid_spec=pltpu.PrefetchScalarGridSpec(
            num_scalar_prefetch=0,
            grid=(rows_p // tm,),
            in_specs=[
                pl.BlockSpec((tm, kp), lambda i: (i, 0)),
                pl.BlockSpec((1, kp), lambda i: (0, 0)),   # gamma stays resident
                pl.BlockSpec((1, kp), lambda i: (0, 0)),   # beta stays resident
            ],
            out_specs=pl.BlockSpec((tm, kp), lambda i: (i, 0)),
        ),
        compiler_params=pltpu.CompilerParams(
            dimension_semantics=("parallel",),
            vmem_limit_bytes=32 * 1024 * 1024,
        ),
        cost_estimate=cost,
    )(x_p, g_p, b_p)
    return out[:rows, :dim].reshape(orig_shape)


# ---------------------- fused PreNorm + Linear fast path ---------------------

def _prenorm_linear_kernel(x_ref, g_ref, b_ref, w_ref, bias_ref, o_ref,
                           *, eps, true_dim):
    x = x_ref[...].astype(jnp.float32)                     # (tm, Kp)
    kp = x.shape[-1]
    inv_d = 1.0 / float(true_dim)
    mean = jnp.sum(x, axis=-1, keepdims=True) * inv_d
    xc = x - mean
    if kp != true_dim:
        mask = lax.broadcasted_iota(jnp.int32, (1, kp), 1) < true_dim
        xc = jnp.where(mask, xc, 0.0)
    var = jnp.sum(xc * xc, axis=-1, keepdims=True) * inv_d
    inv = lax.rsqrt(var + eps)
    y = xc * inv * g_ref[...].astype(jnp.float32) + b_ref[...].astype(jnp.float32)
    # Padded feature columns: gamma/beta are zero-padded -> y == 0 there, and
    # the padded K rows of w are zero, so the matmul is exact.
    y = y.astype(w_ref.dtype)                              # feed MXU in weight dtype
    acc = jnp.dot(y, w_ref[...], preferred_element_type=jnp.float32)
    o_ref[...] = (acc + bias_ref[...].astype(jnp.float32)).astype(o_ref.dtype)


def prenorm_linear_pallas(x, gamma, beta, w, b, *, eps=1e-5,
                          tile_m=256, tile_n=256):
    """Fused fn(LayerNorm(x)) where fn is a Linear: (..., din) -> (..., dout).

    Single pallas_call: the normalized tile never leaves VMEM, the LN is free
    filler under the MXU matmul.  Grid is (M tiles, N tiles); the full
    (padded) K axis lives in each block so LN stats are exact.
    """
    orig_shape = x.shape
    din = orig_shape[-1]
    dout = w.shape[1]
    x2 = x.reshape(-1, din)
    rows = x2.shape[0]
    itemsize = x.dtype.itemsize

    kp = max(_round_up(din, 128), 128)                     # lane-dense K
    tn = min(tile_n, max(_round_up(dout, 128), 128))       # lane-dense N tile
    np_ = _round_up(max(dout, 128), tn)

    tm = min(tile_m, _round_up(rows, 8))
    # Cap tm so double-buffered (x, w, out) tiles fit the scoped VMEM budget
    # on every generation (v7x has only 64 MiB physical / 32 MiB default).
    budget = 16 * 1024 * 1024
    while tm > 8 and 2 * itemsize * (tm * kp + kp * tn + tm * tn) > budget:
        tm //= 2
    tm = max(8, _round_up(tm, 8))
    rows_p = _round_up(rows, tm)

    x_p = jnp.pad(x2, ((0, rows_p - rows), (0, kp - din)))
    g_p = jnp.pad(gamma.reshape(1, din), ((0, 0), (0, kp - din)))
    b_p = jnp.pad(beta.reshape(1, din), ((0, 0), (0, kp - din)))
    w_p = jnp.pad(w, ((0, kp - din), (0, np_ - dout)))
    bias_p = jnp.pad(b.reshape(1, dout), ((0, 0), (0, np_ - dout)))

    cost = pl.CostEstimate(
        flops=2 * rows_p * kp * np_ + 8 * rows_p * kp,
        transcendentals=rows_p,
        bytes_accessed=(rows_p * kp + kp * np_ + rows_p * np_) * itemsize,
    )

    out = pl.pallas_call(
        functools.partial(_prenorm_linear_kernel, eps=eps, true_dim=din),
        out_shape=jax.ShapeDtypeStruct((rows_p, np_), x.dtype),
        grid_spec=pltpu.PrefetchScalarGridSpec(
            num_scalar_prefetch=0,
            grid=(rows_p // tm, np_ // tn),
            in_specs=[
                pl.BlockSpec((tm, kp), lambda i, j: (i, 0)),   # x rows tile
                pl.BlockSpec((1, kp), lambda i, j: (0, 0)),    # gamma resident
                pl.BlockSpec((1, kp), lambda i, j: (0, 0)),    # beta resident
                pl.BlockSpec((kp, tn), lambda i, j: (0, j)),   # weight N tile
                pl.BlockSpec((1, tn), lambda i, j: (0, j)),    # bias N tile
            ],
            out_specs=pl.BlockSpec((tm, tn), lambda i, j: (i, j)),
        ),
        compiler_params=pltpu.CompilerParams(
            dimension_semantics=("parallel", "parallel"),
            vmem_limit_bytes=48 * 1024 * 1024,
        ),
        cost_estimate=cost,
    )(x_p, g_p, b_p, w_p, bias_p)
    return out[:rows, :dout].reshape(orig_shape[:-1] + (dout,))


# --------------------------------- PreNorm ----------------------------------

def pre_norm(x, gamma, beta, fn, **kwargs):
    """return fn(LayerNorm(x), **kwargs) — matches PyTorch PreNorm.forward.

    Generic path: `fn` is an arbitrary callable, so only the LayerNorm runs as
    a Pallas kernel.  When `fn` is a Linear, use prenorm_linear_pallas for the
    fully fused single-kernel fast path.
    """
    return fn(layernorm_pallas(x, gamma, beta), **kwargs)


if __name__ == "__main__":
    batch, seq, dim = 2, 8, 32

    key = jax.random.PRNGKey(0)
    kx, kw, kb = jax.random.split(key, 3)

    x = jax.random.normal(kx, (batch, seq, dim), dtype=jnp.float32)

    # LayerNorm affine params (same init as nn.LayerNorm default)
    gamma = jnp.ones((dim,), jnp.float32)
    beta = jnp.zeros((dim,), jnp.float32)

    # The wrapped fn: a Linear dim -> dim (deterministic random init)
    w = jax.random.normal(kw, (dim, dim), dtype=jnp.float32) * 0.02
    b = jax.random.normal(kb, (dim,), dtype=jnp.float32) * 0.02

    # reference in plain JAX
    mean = jnp.mean(x, axis=-1, keepdims=True)
    var = jnp.mean((x - mean) ** 2, axis=-1, keepdims=True)
    ln_ref = ((x - mean) * jax.lax.rsqrt(var + 1e-5)) * gamma + beta
    ref = ln_ref @ w + b

    # 1) fused fast path: PreNorm wrapping a Linear -> one pallas_call
    out_fused = jax.block_until_ready(prenorm_linear_pallas(x, gamma, beta, w, b))
    assert out_fused.shape == ref.shape
    assert jnp.allclose(out_fused, ref, atol=1e-4, rtol=1e-4)

    # 2) generic path: standalone LayerNorm kernel + arbitrary fn
    out_generic = jax.block_until_ready(pre_norm(x, gamma, beta, lambda y: y @ w + b))
    assert jnp.allclose(out_generic, ref, atol=1e-4, rtol=1e-4)

    print("KERNEL_OK")
</pallas_src>

<mosaic_0001>
module attributes {stable_mosaic.version = 11 : i64} {
  func.func @_prenorm_linear_kernel(%arg0: i32, %arg1: i32, %arg2: memref<16x128xf32, #tpu.memory_space<vmem>>, %arg3: memref<1x128xf32, #tpu.memory_space<vmem>>, %arg4: memref<1x128xf32, #tpu.memory_space<vmem>>, %arg5: memref<128x128xf32, #tpu.memory_space<vmem>>, %arg6: memref<1x128xf32, #tpu.memory_space<vmem>>, %arg7: memref<16x128xf32, #tpu.memory_space<vmem>>) attributes {dimension_semantics = [#tpu.dimension_semantics<parallel>, #tpu.dimension_semantics<parallel>], iteration_bounds = array<i64: 1, 1>, scalar_prefetch = 0 : i64, scratch_operands = 0 : i64, tpu.core_type = #tpu.core_type<tc>, window_params = [{transform_indices = @transform_0, window_bounds = array<i64: 16, 128>}, {pipeline_mode = #tpu.pipeline_mode<synchronous>, transform_indices = @transform_1, window_bounds = array<i64: 1, 128>}, {pipeline_mode = #tpu.pipeline_mode<synchronous>, transform_indices = @transform_2, window_bounds = array<i64: 1, 128>}, {transform_indices = @transform_3, window_bounds = array<i64: 128, 128>}, {transform_indices = @transform_4, window_bounds = array<i64: 1, 128>}, {transform_indices = @transform_5, window_bounds = array<i64: 16, 128>}]} {
    %c0 = arith.constant 0 : index
    %c0_0 = arith.constant 0 : index
    %0 = vector.load %arg2[%c0, %c0_0] : memref<16x128xf32, #tpu.memory_space<vmem>>, vector<16x128xf32>
    %cst = arith.constant dense<0.000000e+00> : vector<16xf32>
    %1 = vector.multi_reduction <add>, %0, %cst [1] : vector<16x128xf32> to vector<16xf32>
    %2 = vector.shape_cast %1 : vector<16xf32> to vector<16x1xf32>
    %cst_1 = arith.constant 3.125000e-02 : f32
    %3 = vector.broadcast %cst_1 : f32 to vector<16x1xf32>
    %4 = arith.mulf %2, %3 : vector<16x1xf32>
    %5 = vector.broadcast %4 : vector<16x1xf32> to vector<16x128xf32>
    %6 = arith.subf %0, %5 : vector<16x128xf32>
    %7 = tpu.iota {dimensions = array<i32: 1>} : vector<1x128xi32>
    %c32_i32 = arith.constant 32 : i32
    %8 = vector.broadcast %c32_i32 : i32 to vector<1x128xi32>
    %9 = arith.cmpi slt, %7, %8 : vector<1x128xi32>
    %cst_2 = arith.constant 0.000000e+00 : f32
    %10 = vector.shape_cast %9 : vector<1x128xi1> to vector<1x128xi1>
    %11 = vector.broadcast %10 : vector<1x128xi1> to vector<16x128xi1>
    %12 = vector.broadcast %cst_2 : f32 to vector<16x128xf32>
    %13 = arith.select %11, %6, %12 : vector<16x128xi1>, vector<16x128xf32>
    %14 = arith.mulf %13, %13 : vector<16x128xf32>
    %cst_3 = arith.constant dense<0.000000e+00> : vector<16xf32>
    %15 = vector.multi_reduction <add>, %14, %cst_3 [1] : vector<16x128xf32> to vector<16xf32>
    %16 = vector.shape_cast %15 : vector<16xf32> to vector<16x1xf32>
    %cst_4 = arith.constant 3.125000e-02 : f32
    %17 = vector.broadcast %cst_4 : f32 to vector<16x1xf32>
    %18 = arith.mulf %16, %17 : vector<16x1xf32>
    %cst_5 = arith.constant 9.99999974E-6 : f32
    %19 = vector.broadcast %cst_5 : f32 to vector<16x1xf32>
    %20 = arith.addf %18, %19 : vector<16x1xf32>
    %21 = math.rsqrt %20 : vector<16x1xf32>
    %22 = vector.broadcast %21 : vector<16x1xf32> to vector<16x128xf32>
    %23 = arith.mulf %13, %22 : vector<16x128xf32>
    %c0_6 = arith.constant 0 : index
    %c0_7 = arith.constant 0 : index
    %24 = vector.load %arg3[%c0_6, %c0_7] : memref<1x128xf32, #tpu.memory_space<vmem>>, vector<1x128xf32>
    %25 = vector.broadcast %24 : vector<1x128xf32> to vector<16x128xf32>
    %26 = arith.mulf %23, %25 : vector<16x128xf32>
    %c0_8 = arith.constant 0 : index
    %c0_9 = arith.constant 0 : index
    %27 = vector.load %arg4[%c0_8, %c0_9] : memref<1x128xf32, #tpu.memory_space<vmem>>, vector<1x128xf32>
    %28 = vector.broadcast %27 : vector<1x128xf32> to vector<16x128xf32>
    %29 = arith.addf %26, %28 : vector<16x128xf32>
    %c0_10 = arith.constant 0 : index
    %c0_11 = arith.constant 0 : index
    %30 = vector.load %arg5[%c0_10, %c0_11] : memref<128x128xf32, #tpu.memory_space<vmem>>, vector<128x128xf32>
    %cst_12 = arith.constant dense<0.000000e+00> : vector<16x128xf32>
    %31 = tpu.matmul %29, %30, %cst_12 {dimension_numbers = #tpu.dot_dimension_numbers<[1], [0], [0], [1], [0, 0, 1, 1], [], []>} : vector<16x128xf32>, vector<128x128xf32>, vector<16x128xf32> -> vector<16x128xf32>
    %c0_13 = arith.constant 0 : index
    %c0_14 = arith.constant 0 : index
    %32 = vector.load %arg6[%c0_13, %c0_14] : memref<1x128xf32, #tpu.memory_space<vmem>>, vector<1x128xf32>
    %33 = vector.broadcast %32 : vector<1x128xf32> to vector<16x128xf32>
    %34 = arith.addf %31, %33 : vector<16x128xf32>
    %c0_15 = arith.constant 0 : index
    %c0_16 = arith.constant 0 : index
    %35 = vector.load %arg7[%c0_15, %c0_16] : memref<16x128xf32, #tpu.memory_space<vmem>>, vector<16x128xf32>
    tpu.vector_store %arg7[%c0_15, %c0_16], %34 {strides = array<i32>} : memref<16x128xf32, #tpu.memory_space<vmem>>, vector<16x128xf32>,
    return
  }
  func.func @transform_0(%arg0: i32, %arg1: i32) -> (i32, i32) {
    %c0_i32 = arith.constant 0 : i32
    %c0_i32_0 = arith.constant 0 : i32
    return %arg0, %c0_i32 : i32, i32
  }
  func.func @transform_1(%arg0: i32, %arg1: i32) -> (i32, i32) {
    %c0_i32 = arith.constant 0 : i32
    %c0_i32_0 = arith.constant 0 : i32
    %c0_i32_1 = arith.constant 0 : i32
    return %c0_i32, %c0_i32_0 : i32, i32
  }
  func.func @transform_2(%arg0: i32, %arg1: i32) -> (i32, i32) {
    %c0_i32 = arith.constant 0 : i32
    %c0_i32_0 = arith.constant 0 : i32
    %c0_i32_1 = arith.constant 0 : i32
    return %c0_i32, %c0_i32_0 : i32, i32
  }
  func.func @transform_3(%arg0: i32, %arg1: i32) -> (i32, i32) {
    %c0_i32 = arith.constant 0 : i32
    %c0_i32_0 = arith.constant 0 : i32
    return %c0_i32, %arg1 : i32, i32
  }
  func.func @transform_4(%arg0: i32, %arg1: i32) -> (i32, i32) {
    %c0_i32 = arith.constant 0 : i32
    %c0_i32_0 = arith.constant 0 : i32
    return %c0_i32, %arg1 : i32, i32
  }
  func.func @transform_5(%arg0: i32, %arg1: i32) -> (i32, i32) {
    %c0_i32 = arith.constant 0 : i32
    return %arg0, %arg1 : i32, i32
  }
}

</mosaic_0001>

<llo_original>
// kernel: tpu_custom_call.1
$region0: #{tpu_custom_call.1}
  #allocation0 [shape = 'u32[]', space=smem, size = 0x4, offset = 0x4, fixed_abs, tag = 'smem constant byte address 0x4 - core index']
  #allocation1 [shape = 'u32[72,128]{1,0:T(1,128)}', space=vmem, size = 0x9000, scoped, tag = 'internal scratch']
  %s0 = inlined_call_operand.hbm [shape: f32[16,128], index: 0, kind: input, shape index: {}]
  %s1 = inlined_call_operand.hbm [shape: f32[1,128], index: 1, kind: input, shape index: {}]
  %s2 = inlined_call_operand.vmem [shape: f32[1,128], index: 2, kind: input, shape index: {}]
  %s3 = inlined_call_operand.hbm [shape: f32[128,128], index: 3, kind: input, shape index: {}]
  %s4 = inlined_call_operand.vmem [shape: f32[1,128], index: 4, kind: input, shape index: {}]
  %s5 = inlined_call_operand.hbm [shape: f32[16,128], index: 5, kind: output, shape index: {}]
  %s6 = sld [smem:[#allocation0]]
  $region42: #{tpu_custom_call.1} parent=0
    _
  %s8 = ssub.s32 1, %s6
  %s9 = scalar_select 0, %s8, %s6
  $region1: #{tpu_custom_call.1} parent=0
    #allocation2 [shape = 'u8[8192]{0}', space=vmem, size = 0x2000, scoped, tag = 'input window, operand 0, single buffered']
    #allocation3 [shape = 's32[1]{0}', space=sflag, size = 0x4, scoped, tag = 'scoped memory for tpu_custom_call.1']
    #allocation4 [shape = 's32[1]{0}', space=sflag, size = 0x4, scoped, tag = 'scoped memory for tpu_custom_call.1']
    #allocation5 [shape = 'u8[512]{0}', space=vmem, size = 0x400, scoped, tag = 'input window, operand 1, single buffered']
    #allocation6 [shape = 's32[1]{0}', space=sflag, size = 0x4, scoped, tag = 'scoped memory for tpu_custom_call.1']
    #allocation7 [shape = 'u8[65536]{0}', space=vmem, size = 0x10000, scoped, tag = 'input window, operand 3, single buffered']
    #allocation8 [shape = 'u8[8192]{0}', space=vmem, size = 0x2000, scoped, tag = 'output window, operand 0, single buffered']
    %10 = vsyncpa [#allocation3], 0
    %11 = vsyncpa [#allocation6], 0
    %12 = vsyncpa [#allocation4], 0
    // Predicated region
    $region2: #{tpu_custom_call.1} parent=1 // pred_check
      _
    $region3: #{tpu_custom_call.1} parent=1 // pred_check_branch
      %14 = sbr.rel (0) target = $region5
    $region4: #{tpu_custom_call.1} parent=1 // pred_region
      %16 = vsyncadd [#allocation3], 0
      %s17 = sshll.u32 %s0, 4
      %s18 = int_to_ptr.hbm [resolvable:$true] %s17
      %s19 = sshll.u32 [#allocation2], 4
      %s20 = int_to_ptr.vmem [resolvable:$true] %s19
      %25 = dma.hbm_to_vmem [thread:$0]  %s18, 256, %s20, [#allocation3], 128, 128, 8
    $region5: #{tpu_custom_call.1} parent=1 // pred_fallthru
      _
    // Predicated region
    $region6: #{tpu_custom_call.1} parent=1 // pred_check
      _
    $region7: #{tpu_custom_call.1} parent=1 // pred_check_branch
      %27 = sbr.rel (0) target = $region9
    $region8: #{tpu_custom_call.1} parent=1 // pred_region
      %29 = vsyncadd [#allocation6], 0
      %s31 = sshll.u32 %s1, 4
      %s32 = int_to_ptr.hbm [resolvable:$true] %s31
      %s33 = sshll.u32 [#allocation5], 4
      %s34 = int_to_ptr.vmem [resolvable:$true] %s33
      %36 = dma.hbm_to_vmem [thread:$0]  %s32, 16, %s34, [#allocation6]
    $region9: #{tpu_custom_call.1} parent=1 // pred_fallthru
      _
    // Predicated region
    $region10: #{tpu_custom_call.1} parent=1 // pred_check
      _
    $region11: #{tpu_custom_call.1} parent=1 // pred_check_branch
      %38 = sbr.rel (0) target = $region13
    $region12: #{tpu_custom_call.1} parent=1 // pred_region
      _
    $region13: #{tpu_custom_call.1} parent=1 // pred_fallthru
      _
    // Predicated region
    $region14: #{tpu_custom_call.1} parent=1 // pred_check
      _
    $region15: #{tpu_custom_call.1} parent=1 // pred_check_branch
      %40 = sbr.rel (0) target = $region17
    $region16: #{tpu_custom_call.1} parent=1 // pred_region
      %42 = vsyncadd [#allocation6], 0
      %s43 = sshll.u32 %s3, 4
      %s44 = int_to_ptr.hbm [resolvable:$true] %s43
      %s45 = sshll.u32 [#allocation7], 4
      %s46 = int_to_ptr.vmem [resolvable:$true] %s45
      %51 = dma.hbm_to_vmem [thread:$0]  %s44, 2048, %s46, [#allocation6], 128, 128, 8
    $region17: #{tpu_custom_call.1} parent=1 // pred_fallthru
      _
    // Predicated region
    $region18: #{tpu_custom_call.1} parent=1 // pred_check
      _
    $region19: #{tpu_custom_call.1} parent=1 // pred_check_branch
      %53 = sbr.rel (0) target = $region21
    $region20: #{tpu_custom_call.1} parent=1 // pred_region
      _
    $region21: #{tpu_custom_call.1} parent=1 // pred_fallthru
      _
    // Predicated region
    $region22: #{tpu_custom_call.1} parent=1 // pred_check
      _
    $region23: #{tpu_custom_call.1} parent=1 // pred_check_branch
      %55 = sbr.rel (0) target = $region25
    $region24: #{tpu_custom_call.1} parent=1 // pred_region
      %57 = dma.done [#allocation3], 256
    $region25: #{tpu_custom_call.1} parent=1 // pred_fallthru
      _
    // Predicated region
    $region26: #{tpu_custom_call.1} parent=1 // pred_check
      _
    $region27: #{tpu_custom_call.1} parent=1 // pred_check_branch
      %59 = sbr.rel (0) target = $region29
    $region28: #{tpu_custom_call.1} parent=1 // pred_region
      %61 = dma.done [#allocation6], 16
    $region29: #{tpu_custom_call.1} parent=1 // pred_fallthru
      _
    // Predicated region
    $region30: #{tpu_custom_call.1} parent=1 // pred_check
      _
    $region31: #{tpu_custom_call.1} parent=1 // pred_check_branch
      %63 = sbr.rel (0) target = $region33
    $region32: #{tpu_custom_call.1} parent=1 // pred_region
      %65 = dma.done [#allocation6], 2048
    $region33: #{tpu_custom_call.1} parent=1 // pred_fallthru
      _
    %v66 = vld [vmem:[#allocation2] sm:$0xff]
    %v67 = vld [vmem:[#allocation2 + $0x8] sm:$0xff]
    %68 = vadd.xlane.f32.xlu0 %v66
    %v69 = vpop.xlane.xlu0 %68
    %70 = vadd.xlane.f32.xlu0 %v67
    %v71 = vpop.xlane.xlu0 %70
    %v72 = vmul.f32 %v69, 0.03125
    %v73 = vmul.f32 %v71, 0.03125
    %v74 = vsub.f32 %v66, %v72
    %v75 = vsub.f32 %v67, %v73
    %v76 = vlaneseq
    %v77 = vand.u32 %v76, 127
    %vm78 = vcmp.lt.s32.totalorder %v77, 32
    %v79 = vsel %vm78, 1, 0
    %vm80 = vcmp.eq.s32.totalorder %v79, 1
    %v81 = vsel %vm80, %v74, 0.0
    %v82 = vsel %vm80, %v75, 0.0
    %v83 = vmul.f32 %v81, %v81
    %v84 = vmul.f32 %v82, %v82
    %85 = vadd.xlane.f32.xlu0 %v83
    %v86 = vpop.xlane.xlu0 %85
    %87 = vadd.xlane.f32.xlu0 %v84
    %v88 = vpop.xlane.xlu0 %87
    %v89 = vmul.f32 %v86, 0.03125
    %v90 = vmul.f32 %v88, 0.03125
    %v91 = vadd.f32 %v89, 1e-05
    %v92 = vadd.f32 %v90, 1e-05
    %v93 = vrsqrt.pop %v91
    %v94 = vmul.f32 %v93, %v91
    %v95 = vmul.f32 %v94, %v93
    %v96 = vmul.f32 0.5, %v95
    %v97 = vsub.f32 1.5, %v96
    %v98 = vmul.f32 %v93, %v97
    %vm99 = vweird.f32 %v91
    %vm100 = vweird.f32 %v93
    %vm101 = vmor %vm99, %vm100
    %v102 = vsel %vm101, %v93, %v98
    %v103 = vrsqrt.pop %v92
    %v104 = vmul.f32 %v103, %v92
    %v105 = vmul.f32 %v104, %v103
    %v106 = vmul.f32 0.5, %v105
    %v107 = vsub.f32 1.5, %v106
    %v108 = vmul.f32 %v103, %v107
    %vm109 = vweird.f32 %v92
    %vm110 = vweird.f32 %v103
    %vm111 = vmor %vm109, %vm110
    %v112 = vsel %vm111, %v103, %v108
    %v113 = vmul.f32 %v81, %v102
    %v114 = vmul.f32 %v82, %v112
    %v115 = vld [vmem:[#allocation5] sm:$0x1]
    %v117 = vperm.slane %v115, 0
    %v119 = vmul.f32 %v113, %v117
    %v120 = vmul.f32 %v114, %v117
    %v121 = vld [vmem:[%s2] sm:$0x1]
    %v123 = vperm.slane %v121, 0
    %v125 = vadd.f32 %v119, %v123
    %v126 = vadd.f32 %v120, %v123
    %v127 = vld [vmem:[#allocation7] sm:$0xff]
    %v128 = vld [vmem:[#allocation7 + $0x8] sm:$0xff]
    %v129 = vld [vmem:[#allocation7 + $0x10] sm:$0xff]
    %v130 = vld [vmem:[#allocation7 + $0x18] sm:$0xff]
    %v131 = vld [vmem:[#allocation7 + $0x20] sm:$0xff]
    %v132 = vld [vmem:[#allocation7 + $0x28] sm:$0xff]
    %v133 = vld [vmem:[#allocation7 + $0x30] sm:$0xff]
    %v134 = vld [vmem:[#allocation7 + $0x38] sm:$0xff]
    %v135 = vld [vmem:[#allocation7 + $0x40] sm:$0xff]
    %v136 = vld [vmem:[#allocation7 + $0x48] sm:$0xff]
    %v137 = vld [vmem:[#allocation7 + $0x50] sm:$0xff]
    %v138 = vld [vmem:[#allocation7 + $0x58] sm:$0xff]
    %v139 = vld [vmem:[#allocation7 + $0x60] sm:$0xff]
    %v140 = vld [vmem:[#allocation7 + $0x68] sm:$0xff]
    %v141 = vld [vmem:[#allocation7 + $0x70] sm:$0xff]
    %v142 = vld [vmem:[#allocation7 + $0x78] sm:$0xff]
    %v143 = vld [vmem:[%s4] sm:$0x1]
    %v145 = vperm.slane %v143, 0
    %147 = vmatpush.msra.mxu0 %v142
    %148 = vmatpush.msra.mxu0 %v141
    %149 = vmatpush.msra.mxu0 %v140
    %150 = vmatpush.msra.mxu0 %v139
    %151 = vmatpush.msra.mxu0 %v138
    %152 = vmatpush.msra.mxu0 %v137
    %153 = vmatpush.msra.mxu0 %v136
    %154 = vmatpush.msra.mxu0 %v135
    %155 = vmatpush.msra.mxu0 %v134
    %156 = vmatpush.msra.mxu0 %v133
    %157 = vmatpush.msra.mxu0 %v132
    %158 = vmatpush.msra.mxu0 %v131
    %159 = vmatpush.msra.mxu0 %v130
    %160 = vmatpush.msra.mxu0 %v129
    %161 = vmatpush.msra.mxu0 %v128
    %162 = vmatpush.msra.mxu0 %v127
    %163 = vmatmul.f32.gmra.mxu0 %v125
    %v164 = vpop.f32.mrf.mxu0
    %v165 = vadd.f32 %v145, %v164
    %166 = vmatmul.f32.gmra.mxu0 %v126
    %v167 = vpop.f32.mrf.mxu0
    %v168 = vadd.f32 %v145, %v167
    %169 = vdwg.mxu0
    %170 = vst [vmem:[#allocation8] sm:$0xff] %v165
    %171 = vst [vmem:[#allocation8 + $0x8] sm:$0xff] %v168
    // Predicated region
    $region34: #{tpu_custom_call.1} parent=1 // pred_check
      _
    $region35: #{tpu_custom_call.1} parent=1 // pred_check_branch
      %173 = sbr.rel (0) target = $region37
    $region36: #{tpu_custom_call.1} parent=1 // pred_region
      %175 = vsyncadd [#allocation4], 0
      %s176 = sshll.u32 [#allocation8], 4
      %s177 = int_to_ptr.vmem [resolvable:$true] %s176
      %s178 = sshll.u32 %s5, 4
      %s179 = int_to_ptr.hbm [resolvable:$true] %s178
      %184 = dma.vmem_to_hbm [thread:$0]  %s177, 256, %s179, [#allocation4], 128, 128, 8
    $region37: #{tpu_custom_call.1} parent=1 // pred_fallthru
      _
    // Predicated region
    $region38: #{tpu_custom_call.1} parent=1 // pred_check
      _
    $region39: #{tpu_custom_call.1} parent=1 // pred_check_branch
      %186 = sbr.rel (0) target = $region41
    $region40: #{tpu_custom_call.1} parent=1 // pred_region
      %188 = dma.done [#allocation4], 256
    $region41: #{tpu_custom_call.1} parent=1 // pred_fallthru
      _
    %189 = vsyncpa [#allocation3], 1
    %190 = vsyncpa [#allocation6], 1
    %191 = vsyncpa [#allocation4], 1

</llo_original>
